<compile_context>
chip_gen: v7x
topology: tpu7x:2x2x1
jax: 0.10.0
libtpu: 0.0.40
codegen_flags: <defaults>
</compile_context>

<pallas_src>
import jax
import jax.numpy as jnp
from jax.experimental import pallas as pl
from jax.experimental.pallas import tpu as pltpu

NUM_LAYERS = 2
HIDDEN = 32
BATCH = 8
OUT_CLASSES = 2
LANES = 128            # lane-dense padded width for hidden features / logits
MIN_PALLAS_BATCH = 128  # below this, plain XLA is faster than a kernel launch


def _round_up(n, m):
    return ((n + m - 1) // m) * m


def _choose_batch_tile(B, batch_tile):
    """Batch tile: multiple of 8 sublanes.  When more than one grid step is
    needed, round the step count up to an even number so v7x's two TensorCores
    split the 'parallel' batch axis evenly (irrelevant on single-TC v5e/v6e)."""
    steps = max(1, pl.cdiv(B, batch_tile))
    if steps > 1 and steps % 2 == 1:
        steps += 1
    return _round_up(pl.cdiv(B, steps), 8)


def _mlp_kernel(x_ref, w0_ref, w12_ref, b_ref, o_ref):
    # x_ref:   [TB, H]        f32 activations (native 32-lane width)
    # w0_ref:  [H, 128]       bf16 layer-0 weight (zero-padded output lanes)
    # w12_ref: [2, 128, 128]  bf16 stacked {W1, Wf} (zero-padded)
    # b_ref:   [3, 128]       f32 stacked {b0, b1, bf} (zero-padded)
    # o_ref:   [TB, 128]      f32 lane-dense output slab (logits in cols 0:2)
    x = x_ref[...].astype(jnp.bfloat16)

    # layer 0: Linear + ReLU (Dropout == identity in eval mode), K = 32
    h = jnp.dot(x, w0_ref[...], preferred_element_type=jnp.float32) + b_ref[0:1, :]
    h = jnp.maximum(h, 0.0)

    # layer 1: Linear + ReLU
    h = jnp.dot(h.astype(jnp.bfloat16), w12_ref[0],
                preferred_element_type=jnp.float32) + b_ref[1:2, :]
    h = jnp.maximum(h, 0.0)

    # final: Linear(H, 2), padded to 128 output lanes (cols 2: are exactly 0)
    out = jnp.dot(h.astype(jnp.bfloat16), w12_ref[1],
                  preferred_element_type=jnp.float32) + b_ref[2:3, :]
    o_ref[...] = out.astype(o_ref.dtype)


def pack_params(params, weight_dtype=jnp.bfloat16):
    """One-time packing/padding of module parameters (hoisted off the call path).
    Zero padding is mathematically inert: padded rows/cols of W and b are 0, so
    padded activation lanes stay exactly 0 through every layer."""
    H = params["w0"].shape[0]
    w0 = jnp.zeros((H, LANES), weight_dtype).at[:, :H].set(
        params["w0"].astype(weight_dtype))
    w12 = jnp.zeros((2, LANES, LANES), weight_dtype)
    w12 = w12.at[0, :H, :H].set(params["w1"].astype(weight_dtype))
    w12 = w12.at[1, :H, :OUT_CLASSES].set(params["wf"].astype(weight_dtype))
    b = jnp.zeros((3, LANES), jnp.float32)
    b = b.at[0, :H].set(params["b0"].astype(jnp.float32))
    b = b.at[1, :H].set(params["b1"].astype(jnp.float32))
    b = b.at[2, :OUT_CLASSES].set(params["bf"].astype(jnp.float32))
    return {"w0": w0, "w12": w12, "b": b}


def _xla_forward(x, packed):
    """Plain fused-XLA path for tiny batches (kernel launch overhead dominates)."""
    h = jnp.maximum(x @ packed["w0"].astype(jnp.float32) + packed["b"][0], 0.0)
    h = jnp.maximum(h @ packed["w12"][0].astype(jnp.float32) + packed["b"][1], 0.0)
    out = h @ packed["w12"][1].astype(jnp.float32) + packed["b"][2]
    return out[:, :OUT_CLASSES]


def language_detector_forward(x, packed, *, batch_tile=1024, force_pallas=False):
    """x: [B, hidden] float; packed: output of pack_params(). Returns [B, 2] f32."""
    B, H = x.shape
    assert packed["w0"].shape[0] == H and H <= LANES

    if B < MIN_PALLAS_BATCH and not force_pallas:
        return _xla_forward(x.astype(jnp.float32), packed)

    TB = _choose_batch_tile(B, batch_tile)

    out_padded = pl.pallas_call(
        _mlp_kernel,
        out_shape=jax.ShapeDtypeStruct((B, LANES), jnp.float32),
        grid_spec=pltpu.PrefetchScalarGridSpec(
            num_scalar_prefetch=0,
            grid=(pl.cdiv(B, TB),),
            in_specs=[
                # activations: one batch tile per grid step, native 32-lane width
                pl.BlockSpec((TB, H), lambda i: (i, 0)),
                # weights / biases: same block every step -> VMEM-resident
                pl.BlockSpec((H, LANES), lambda i: (0, 0)),
                pl.BlockSpec((2, LANES, LANES), lambda i: (0, 0, 0)),
                pl.BlockSpec((3, LANES), lambda i: (0, 0)),
            ],
            out_specs=pl.BlockSpec((TB, LANES), lambda i: (i, 0)),
        ),
        compiler_params=pltpu.CompilerParams(
            dimension_semantics=("parallel",),  # shard batch tiles across TCs (v7x)
        ),
    )(x.astype(jnp.float32), packed["w0"], packed["w12"], packed["b"])

    # Lane-dense slab -> real logits.
    return out_padded[:, :OUT_CLASSES]


def init_params(key, hidden, num_layers):
    """Deterministic synthetic parameter init (shapes match the nn.Linear layers)."""
    assert num_layers == NUM_LAYERS, "script hardcodes a 2-hidden-layer kernel"
    keys = jax.random.split(key, 2 * num_layers + 2)
    scale = 1.0 / jnp.sqrt(hidden)
    return {
        "w0": jax.random.uniform(keys[0], (hidden, hidden), jnp.float32, -scale, scale),
        "b0": jax.random.uniform(keys[1], (hidden,), jnp.float32, -scale, scale),
        "w1": jax.random.uniform(keys[2], (hidden, hidden), jnp.float32, -scale, scale),
        "b1": jax.random.uniform(keys[3], (hidden,), jnp.float32, -scale, scale),
        "wf": jax.random.uniform(keys[4], (hidden, OUT_CLASSES), jnp.float32, -scale, scale),
        "bf": jax.random.uniform(keys[5], (OUT_CLASSES,), jnp.float32, -scale, scale),
    }


def reference_forward(x, p):
    h = jnp.maximum(x @ p["w0"] + p["b0"], 0.0)
    h = jnp.maximum(h @ p["w1"] + p["b1"], 0.0)
    return h @ p["wf"] + p["bf"]


if __name__ == "__main__":
    key = jax.random.PRNGKey(0)
    k_x, k_p, k_x2 = jax.random.split(key, 3)

    params = init_params(k_p, HIDDEN, NUM_LAYERS)
    packed = pack_params(params)          # one-time packing (hoisted off call path)

    TOL = dict(atol=3e-2, rtol=3e-2)      # bf16 matmuls with f32 accumulation

    # Small batch (module-native size): force the Pallas kernel (single grid step).
    x = jax.random.normal(k_x, (BATCH, HIDDEN), jnp.float32)
    out = jax.block_until_ready(language_detector_forward(x, packed, force_pallas=True))
    ref = reference_forward(x, params)
    assert out.shape == (BATCH, OUT_CLASSES)
    assert jnp.allclose(out, ref, **TOL), "Pallas mismatch vs f32 reference (B=8)"

    # Tiny-batch dispatch path (plain XLA fallback) agrees too.
    out_xla = jax.block_until_ready(language_detector_forward(x, packed))
    assert jnp.allclose(out_xla, ref, **TOL), "XLA fallback mismatch (B=8)"

    # Larger batch, default tile: one lane-dense grid step, no batch padding.
    B2 = 600
    x2 = jax.random.normal(k_x2, (B2, HIDDEN), jnp.float32)
    out2 = jax.block_until_ready(language_detector_forward(x2, packed))
    ref2 = reference_forward(x2, params)
    assert out2.shape == (B2, OUT_CLASSES)
    assert jnp.allclose(out2, ref2, **TOL), "Pallas mismatch vs f32 reference (B=600)"

    # Smaller tile: even number of grid steps with a ragged tail block
    # (exercises masked tail writes and the v7x two-core split).
    out3 = jax.block_until_ready(
        language_detector_forward(x2, packed, batch_tile=256))
    assert jnp.allclose(out3, ref2, **TOL), "Pallas mismatch vs f32 reference (B=600, tiled)"

    print("KERNEL_OK")
</pallas_src>

<mosaic_0001>
module attributes {stable_mosaic.version = 11 : i64} {
  func.func @_mlp_kernel(%arg0: i32, %arg1: memref<8x32xf32, #tpu.memory_space<vmem>>, %arg2: memref<32x128xbf16, #tpu.memory_space<vmem>>, %arg3: memref<2x128x128xbf16, #tpu.memory_space<vmem>>, %arg4: memref<3x128xf32, #tpu.memory_space<vmem>>, %arg5: memref<8x128xf32, #tpu.memory_space<vmem>>) attributes {dimension_semantics = [#tpu.dimension_semantics<parallel>], iteration_bounds = array<i64: 1>, scalar_prefetch = 0 : i64, scratch_operands = 0 : i64, tpu.core_type = #tpu.core_type<tc>, window_params = [{transform_indices = @transform_0, window_bounds = array<i64: 8, 32>}, {pipeline_mode = #tpu.pipeline_mode<synchronous>, transform_indices = @transform_1, window_bounds = array<i64: 32, 128>}, {pipeline_mode = #tpu.pipeline_mode<synchronous>, transform_indices = @transform_2, window_bounds = array<i64: 2, 128, 128>}, {pipeline_mode = #tpu.pipeline_mode<synchronous>, transform_indices = @transform_3, window_bounds = array<i64: 3, 128>}, {transform_indices = @transform_4, window_bounds = array<i64: 8, 128>}]} {
    %c0 = arith.constant 0 : index
    %c0_0 = arith.constant 0 : index
    %0 = vector.load %arg1[%c0, %c0_0] : memref<8x32xf32, #tpu.memory_space<vmem>>, vector<8x32xf32>
    %1 = arith.truncf %0 : vector<8x32xf32> to vector<8x32xbf16>
    %c0_1 = arith.constant 0 : index
    %c0_2 = arith.constant 0 : index
    %2 = vector.load %arg2[%c0_1, %c0_2] : memref<32x128xbf16, #tpu.memory_space<vmem>>, vector<32x128xbf16>
    %cst = arith.constant dense<0.000000e+00> : vector<8x128xf32>
    %3 = tpu.matmul %1, %2, %cst {dimension_numbers = #tpu.dot_dimension_numbers<[1], [0], [0], [1], [0, 0, 1, 1], [], []>} : vector<8x32xbf16>, vector<32x128xbf16>, vector<8x128xf32> -> vector<8x128xf32>
    %c0_3 = arith.constant 0 : index
    %c0_4 = arith.constant 0 : index
    %4 = vector.load %arg4[%c0_3, %c0_4] : memref<3x128xf32, #tpu.memory_space<vmem>>, vector<1x128xf32>
    %5 = vector.broadcast %4 : vector<1x128xf32> to vector<8x128xf32>
    %6 = arith.addf %3, %5 : vector<8x128xf32>
    %cst_5 = arith.constant 0.000000e+00 : f32
    %7 = vector.broadcast %cst_5 : f32 to vector<8x128xf32>
    %8 = arith.maximumf %6, %7 : vector<8x128xf32>
    %9 = arith.truncf %8 : vector<8x128xf32> to vector<8x128xbf16>
    %c0_6 = arith.constant 0 : index
    %c0_7 = arith.constant 0 : index
    %c0_8 = arith.constant 0 : index
    %10 = vector.load %arg3[%c0_6, %c0_7, %c0_8] : memref<2x128x128xbf16, #tpu.memory_space<vmem>>, vector<1x128x128xbf16>
    %11 = vector.shape_cast %10 : vector<1x128x128xbf16> to vector<128x128xbf16>
    %cst_9 = arith.constant dense<0.000000e+00> : vector<8x128xf32>
    %12 = tpu.matmul %9, %11, %cst_9 {dimension_numbers = #tpu.dot_dimension_numbers<[1], [0], [0], [1], [0, 0, 1, 1], [], []>} : vector<8x128xbf16>, vector<128x128xbf16>, vector<8x128xf32> -> vector<8x128xf32>
    %c1 = arith.constant 1 : index
    %c0_10 = arith.constant 0 : index
    %13 = vector.load %arg4[%c1, %c0_10] : memref<3x128xf32, #tpu.memory_space<vmem>>, vector<1x128xf32>
    %14 = vector.broadcast %13 : vector<1x128xf32> to vector<8x128xf32>
    %15 = arith.addf %12, %14 : vector<8x128xf32>
    %cst_11 = arith.constant 0.000000e+00 : f32
    %16 = vector.broadcast %cst_11 : f32 to vector<8x128xf32>
    %17 = arith.maximumf %15, %16 : vector<8x128xf32>
    %18 = arith.truncf %17 : vector<8x128xf32> to vector<8x128xbf16>
    %c1_12 = arith.constant 1 : index
    %c0_13 = arith.constant 0 : index
    %c0_14 = arith.constant 0 : index
    %19 = vector.load %arg3[%c1_12, %c0_13, %c0_14] : memref<2x128x128xbf16, #tpu.memory_space<vmem>>, vector<1x128x128xbf16>
    %20 = vector.shape_cast %19 : vector<1x128x128xbf16> to vector<128x128xbf16>
    %cst_15 = arith.constant dense<0.000000e+00> : vector<8x128xf32>
    %21 = tpu.matmul %18, %20, %cst_15 {dimension_numbers = #tpu.dot_dimension_numbers<[1], [0], [0], [1], [0, 0, 1, 1], [], []>} : vector<8x128xbf16>, vector<128x128xbf16>, vector<8x128xf32> -> vector<8x128xf32>
    %c2 = arith.constant 2 : index
    %c0_16 = arith.constant 0 : index
    %22 = vector.load %arg4[%c2, %c0_16] : memref<3x128xf32, #tpu.memory_space<vmem>>, vector<1x128xf32>
    %23 = vector.broadcast %22 : vector<1x128xf32> to vector<8x128xf32>
    %24 = arith.addf %21, %23 : vector<8x128xf32>
    %c0_17 = arith.constant 0 : index
    %c0_18 = arith.constant 0 : index
    %25 = vector.load %arg5[%c0_17, %c0_18] : memref<8x128xf32, #tpu.memory_space<vmem>>, vector<8x128xf32>
    tpu.vector_store %arg5[%c0_17, %c0_18], %24 {strides = array<i32>} : memref<8x128xf32, #tpu.memory_space<vmem>>, vector<8x128xf32>,
    return
  }
  func.func @transform_0(%arg0: i32) -> (i32, i32) {
    %c0_i32 = arith.constant 0 : i32
    %c0_i32_0 = arith.constant 0 : i32
    return %arg0, %c0_i32 : i32, i32
  }
  func.func @transform_1(%arg0: i32) -> (i32, i32) {
    %c0_i32 = arith.constant 0 : i32
    %c0_i32_0 = arith.constant 0 : i32
    %c0_i32_1 = arith.constant 0 : i32
    return %c0_i32, %c0_i32_0 : i32, i32
  }
  func.func @transform_2(%arg0: i32) -> (i32, i32, i32) {
    %c0_i32 = arith.constant 0 : i32
    %c0_i32_0 = arith.constant 0 : i32
    %c0_i32_1 = arith.constant 0 : i32
    %c0_i32_2 = arith.constant 0 : i32
    return %c0_i32, %c0_i32_0, %c0_i32_1 : i32, i32, i32
  }
  func.func @transform_3(%arg0: i32) -> (i32, i32) {
    %c0_i32 = arith.constant 0 : i32
    %c0_i32_0 = arith.constant 0 : i32
    %c0_i32_1 = arith.constant 0 : i32
    return %c0_i32, %c0_i32_0 : i32, i32
  }
  func.func @transform_4(%arg0: i32) -> (i32, i32) {
    %c0_i32 = arith.constant 0 : i32
    %c0_i32_0 = arith.constant 0 : i32
    return %arg0, %c0_i32 : i32, i32
  }
}

</mosaic_0001>

<llo_original>
// kernel: tpu_custom_call.1
$region0: #{tpu_custom_call.1}
  #allocation0 [shape = 'u32[]', space=smem, size = 0x4, offset = 0x4, fixed_abs, tag = 'smem constant byte address 0x4 - core index']
  #allocation1 [shape = 'u32[144,128]{1,0:T(1,128)}', space=vmem, size = 0x12000, scoped, tag = 'internal scratch']
  %s0 = inlined_call_operand.hbm [shape: f32[8,32], index: 0, kind: input, shape index: {}]
  %s1 = inlined_call_operand.hbm [shape: bf16[32,128], index: 1, kind: input, shape index: {}]
  %s2 = inlined_call_operand.hbm [shape: bf16[2,128,128], index: 2, kind: input, shape index: {}]
  %s3 = inlined_call_operand.vmem [shape: f32[3,128], index: 3, kind: input, shape index: {}]
  %s4 = inlined_call_operand.hbm [shape: f32[8,128], index: 4, kind: output, shape index: {}]
  %s5 = sld [smem:[#allocation0]]
  $region38: #{tpu_custom_call.1} parent=0
    _
  %s7 = ssub.s32 1, %s5
  %s8 = scalar_select 0, %s7, %s5
  $region1: #{tpu_custom_call.1} parent=0
    #allocation2 [shape = 'u8[4096]{0}', space=vmem, size = 0x1000, scoped, tag = 'input window, operand 0, single buffered']
    #allocation3 [shape = 's32[1]{0}', space=sflag, size = 0x4, scoped, tag = 'scoped memory for tpu_custom_call.1']
    #allocation4 [shape = 's32[1]{0}', space=sflag, size = 0x4, scoped, tag = 'scoped memory for tpu_custom_call.1']
    #allocation5 [shape = 'u8[8192]{0}', space=vmem, size = 0x2000, scoped, tag = 'input window, operand 1, single buffered']
    #allocation6 [shape = 's32[1]{0}', space=sflag, size = 0x4, scoped, tag = 'scoped memory for tpu_custom_call.1']
    #allocation7 [shape = 'u8[65536]{0}', space=vmem, size = 0x10000, scoped, tag = 'input window, operand 2, single buffered']
    #allocation8 [shape = 'u8[4096]{0}', space=vmem, size = 0x1000, scoped, tag = 'output window, operand 0, single buffered']
    %9 = vsyncpa [#allocation3], 0
    %10 = vsyncpa [#allocation6], 0
    %11 = vsyncpa [#allocation4], 0
    // Predicated region
    $region2: #{tpu_custom_call.1} parent=1 // pred_check
      _
    $region3: #{tpu_custom_call.1} parent=1 // pred_check_branch
      %13 = sbr.rel (0) target = $region5
    $region4: #{tpu_custom_call.1} parent=1 // pred_region
      %s15 = ssub.s32 128, 128
      %16 = vsyncadd [#allocation3], %s15
      %s18 = sshll.u32 [#allocation2], 4
      %s19 = int_to_ptr.vmem [resolvable:$true] %s18
      %21 = dma.hbm_to_vmem [thread:$0]  %s0, 128, %s19, [#allocation3]
    $region5: #{tpu_custom_call.1} parent=1 // pred_fallthru
      _
    // Predicated region
    $region6: #{tpu_custom_call.1} parent=1 // pred_check
      _
    $region7: #{tpu_custom_call.1} parent=1 // pred_check_branch
      %23 = sbr.rel (0) target = $region9
    $region8: #{tpu_custom_call.1} parent=1 // pred_region
      %s25 = ssub.s32 256, 256
      %26 = vsyncadd [#allocation6], %s25
      %s27 = sshll.u32 [#allocation5], 4
      %s28 = int_to_ptr.vmem [resolvable:$true] %s27
      %33 = dma.hbm_to_vmem [thread:$0]  %s1, 256, %s28, [#allocation6], 64, 64, 4
    $region9: #{tpu_custom_call.1} parent=1 // pred_fallthru
      _
    // Predicated region
    $region10: #{tpu_custom_call.1} parent=1 // pred_check
      _
    $region11: #{tpu_custom_call.1} parent=1 // pred_check_branch
      %35 = sbr.rel (0) target = $region13
    $region12: #{tpu_custom_call.1} parent=1 // pred_region
      %s37 = ssub.s32 2048, 2048
      %38 = vsyncadd [#allocation6], %s37
      %s39 = sshll.u32 [#allocation7], 4
      %s40 = int_to_ptr.vmem [resolvable:$true] %s39
      %45 = dma.hbm_to_vmem [thread:$0]  %s2, 2048, %s40, [#allocation6], 64, 64, 4
    $region13: #{tpu_custom_call.1} parent=1 // pred_fallthru
      _
    // Predicated region
    $region14: #{tpu_custom_call.1} parent=1 // pred_check
      _
    $region15: #{tpu_custom_call.1} parent=1 // pred_check_branch
      %47 = sbr.rel (0) target = $region17
    $region16: #{tpu_custom_call.1} parent=1 // pred_region
      _
    $region17: #{tpu_custom_call.1} parent=1 // pred_fallthru
      _
    // Predicated region
    $region18: #{tpu_custom_call.1} parent=1 // pred_check
      _
    $region19: #{tpu_custom_call.1} parent=1 // pred_check_branch
      %49 = sbr.rel (0) target = $region21
    $region20: #{tpu_custom_call.1} parent=1 // pred_region
      %50 = dma.done [#allocation3], 128
    $region21: #{tpu_custom_call.1} parent=1 // pred_fallthru
      _
    // Predicated region
    $region22: #{tpu_custom_call.1} parent=1 // pred_check
      _
    $region23: #{tpu_custom_call.1} parent=1 // pred_check_branch
      %52 = sbr.rel (0) target = $region25
    $region24: #{tpu_custom_call.1} parent=1 // pred_region
      %53 = dma.done [#allocation6], 256
    $region25: #{tpu_custom_call.1} parent=1 // pred_fallthru
      _
    // Predicated region
    $region26: #{tpu_custom_call.1} parent=1 // pred_check
      _
    $region27: #{tpu_custom_call.1} parent=1 // pred_check_branch
      %55 = sbr.rel (0) target = $region29
    $region28: #{tpu_custom_call.1} parent=1 // pred_region
      %56 = dma.done [#allocation6], 2048
    $region29: #{tpu_custom_call.1} parent=1 // pred_fallthru
      _
    %v58 = vld [vmem:[#allocation2] sm:$0xff]
    %v59 = vpack.c.bf16 %v58, %v58
    %v60 = vld [vmem:[#allocation5] sm:$0xf]
    %v61 = vld [vmem:[#allocation5 + $0x4] sm:$0xf]
    %v62 = vld [vmem:[#allocation5 + $0x8] sm:$0xf]
    %v63 = vld [vmem:[#allocation5 + $0xc] sm:$0xf]
    %v64 = vld [vmem:[%s3] sm:$0x1]
    %v65 = vlaneseq
    %v66 = vshrl.u32 %v65, 7
    %v67 = vsub.s32 0, %v66
    %v68 = vrot.slane %v64, %v67
    %v73 = vunpack.c.l.b16 %v60
    %v74 = vunpack.c.l.b16 %v61
    %v75 = vunpack.c.l.b16 %v62
    %v76 = vunpack.c.l.b16 %v63
    %v77 = vpack.c.b16 %v74, %v73
    %v78 = vpack.c.b16 %v76, %v75
    %vm81 = vcmask 261120
    %v83 = vsel %vm81, %v59, 0
    %85 = vmatprep.subr.bf16.mxu0 0
    %86 = vmatpush1.bf16.msra.mxu0 %v77
    %87 = vmatprep.subr.bf16.mxu0 0
    %88 = vmatpush1.bf16.msra.mxu0 %v78
    %89 = vmatprep.subr.bf16.mxu0 0
    %90 = vmatpush1.bf16.msra.mxu0 0
    %91 = vmatprep.subr.bf16.mxu0 0
    %92 = vmatpush1.bf16.msra.mxu0 0
    %93 = vmatprep.subr.bf16.mxu0 0
    %94 = vmatpush1.bf16.msra.mxu0 0
    %95 = vmatprep.subr.bf16.mxu0 0
    %96 = vmatpush1.bf16.msra.mxu0 0
    %97 = vmatprep.subr.bf16.mxu0 0
    %98 = vmatpush1.bf16.msra.mxu0 0
    %99 = vmatprep.subr.bf16.mxu0 0
    %100 = vmatpush1.bf16.msra.mxu0 0
    %101 = vmatprep.subr.bf16.mxu0 0
    %102 = vmatpush1.bf16.msra.mxu0 0
    %103 = vmatprep.subr.bf16.mxu0 0
    %104 = vmatpush1.bf16.msra.mxu0 0
    %105 = vmatprep.subr.bf16.mxu0 0
    %106 = vmatpush1.bf16.msra.mxu0 0
    %107 = vmatprep.subr.bf16.mxu0 0
    %108 = vmatpush1.bf16.msra.mxu0 0
    %109 = vmatprep.subr.bf16.mxu0 0
    %110 = vmatpush1.bf16.msra.mxu0 0
    %111 = vmatprep.subr.bf16.mxu0 0
    %112 = vmatpush1.bf16.msra.mxu0 0
    %113 = vmatprep.subr.bf16.mxu0 0
    %114 = vmatpush1.bf16.msra.mxu0 0
    %115 = vmatprep.subr.bf16.mxu0 0
    %116 = vmatpush1.bf16.msra.mxu0 0
    %117 = vmatprep.mubr.bf16.mxu0 0
    %118 = vmatmul.mubr.bf16.gmra.mrb[0].mxu0 %v83
    %v119 = vpop.f32.mrb[0].mxu0
    %v120 = vadd.f32 %v68, %v119
    %v121 = vpop.f32.mrb[0].mxu0
    %v122 = vpop.f32.mrb[0].mxu0
    %v123 = vpop.f32.mrb[0].mxu0
    %124 = vdwg.mxu0
    %v125 = vmax.f32 %v120, 0.0
    %v126 = vpack.c.bf16 %v125, %v125
    %v127 = vld [vmem:[#allocation7] sm:$0xf]
    %v128 = vld [vmem:[#allocation7 + $0x4] sm:$0xf]
    %v129 = vld [vmem:[#allocation7 + $0x8] sm:$0xf]
    %v130 = vld [vmem:[#allocation7 + $0xc] sm:$0xf]
    %v131 = vld [vmem:[#allocation7 + $0x10] sm:$0xf]
    %v132 = vld [vmem:[#allocation7 + $0x14] sm:$0xf]
    %v133 = vld [vmem:[#allocation7 + $0x18] sm:$0xf]
    %v134 = vld [vmem:[#allocation7 + $0x1c] sm:$0xf]
    %v135 = vld [vmem:[#allocation7 + $0x20] sm:$0xf]
    %v136 = vld [vmem:[#allocation7 + $0x24] sm:$0xf]
    %v137 = vld [vmem:[#allocation7 + $0x28] sm:$0xf]
    %v138 = vld [vmem:[#allocation7 + $0x2c] sm:$0xf]
    %v139 = vld [vmem:[#allocation7 + $0x30] sm:$0xf]
    %v140 = vld [vmem:[#allocation7 + $0x34] sm:$0xf]
    %v141 = vld [vmem:[#allocation7 + $0x38] sm:$0xf]
    %v142 = vld [vmem:[#allocation7 + $0x3c] sm:$0xf]
    %v143 = vld [vmem:[%s3 + $0x1] sm:$0x1]
    %v144 = vlaneseq
    %v145 = vshrl.u32 %v144, 7
    %v146 = vsub.s32 0, %v145
    %v147 = vrot.slane %v143, %v146
    %v164 = vunpack.c.l.b16 %v127
    %v165 = vunpack.c.l.b16 %v128
    %v166 = vunpack.c.l.b16 %v129
    %v167 = vunpack.c.l.b16 %v130
    %v168 = vunpack.c.l.b16 %v131
    %v169 = vunpack.c.l.b16 %v132
    %v170 = vunpack.c.l.b16 %v133
    %v171 = vunpack.c.l.b16 %v134
    %v172 = vunpack.c.l.b16 %v135
    %v173 = vunpack.c.l.b16 %v136
    %v174 = vunpack.c.l.b16 %v137
    %v175 = vunpack.c.l.b16 %v138
    %v176 = vunpack.c.l.b16 %v139
    %v177 = vunpack.c.l.b16 %v140
    %v178 = vunpack.c.l.b16 %v141
    %v179 = vunpack.c.l.b16 %v142
    %v180 = vpack.c.b16 %v165, %v164
    %v181 = vpack.c.b16 %v167, %v166
    %v182 = vpack.c.b16 %v169, %v168
    %v183 = vpack.c.b16 %v171, %v170
    %v184 = vpack.c.b16 %v173, %v172
    %v185 = vpack.c.b16 %v175, %v174
    %v186 = vpack.c.b16 %v177, %v176
    %v187 = vpack.c.b16 %v179, %v178
    %196 = vmatprep.subr.bf16.mxu0 0
    %197 = vmatpush1.bf16.msra.mxu0 %v180
    %198 = vmatprep.subr.bf16.mxu0 0
    %199 = vmatpush1.bf16.msra.mxu0 %v181
    %200 = vmatprep.subr.bf16.mxu0 0
    %201 = vmatpush1.bf16.msra.mxu0 %v182
    %202 = vmatprep.subr.bf16.mxu0 0
    %203 = vmatpush1.bf16.msra.mxu0 %v183
    %204 = vmatprep.subr.bf16.mxu0 0
    %205 = vmatpush1.bf16.msra.mxu0 %v184
    %206 = vmatprep.subr.bf16.mxu0 0
    %207 = vmatpush1.bf16.msra.mxu0 %v185
    %208 = vmatprep.subr.bf16.mxu0 0
    %209 = vmatpush1.bf16.msra.mxu0 %v186
    %210 = vmatprep.subr.bf16.mxu0 0
    %211 = vmatpush1.bf16.msra.mxu0 %v187
    %212 = vmatprep.subr.bf16.mxu0 0
    %213 = vmatpush1.bf16.msra.mxu0 0
    %214 = vmatprep.subr.bf16.mxu0 0
    %215 = vmatpush1.bf16.msra.mxu0 0
    %216 = vmatprep.subr.bf16.mxu0 0
    %217 = vmatpush1.bf16.msra.mxu0 0
    %218 = vmatprep.subr.bf16.mxu0 0
    %219 = vmatpush1.bf16.msra.mxu0 0
    %220 = vmatprep.subr.bf16.mxu0 0
    %221 = vmatpush1.bf16.msra.mxu0 0
    %222 = vmatprep.subr.bf16.mxu0 0
    %223 = vmatpush1.bf16.msra.mxu0 0
    %224 = vmatprep.subr.bf16.mxu0 0
    %225 = vmatpush1.bf16.msra.mxu0 0
    %226 = vmatprep.subr.bf16.mxu0 0
    %227 = vmatpush1.bf16.msra.mxu0 0
    %228 = vmatprep.mubr.bf16.mxu0 0
    %229 = vmatmul.mubr.bf16.gmra.mrb[0].mxu0 %v126
    %v230 = vpop.f32.mrb[0].mxu0
    %v231 = vadd.f32 %v147, %v230
    %v232 = vpop.f32.mrb[0].mxu0
    %v233 = vpop.f32.mrb[0].mxu0
    %v234 = vpop.f32.mrb[0].mxu0
    %235 = vdwg.mxu0
    %v236 = vmax.f32 %v231, 0.0
    %v237 = vpack.c.bf16 %v236, %v236
    %s238 = scalar_lea.vmem [#allocation7], 64
    %v239 = vld [vmem:[%s238] sm:$0xf]
    %v240 = vld [vmem:[%s238 + $0x4] sm:$0xf]
    %v241 = vld [vmem:[%s238 + $0x8] sm:$0xf]
    %v242 = vld [vmem:[%s238 + $0xc] sm:$0xf]
    %v243 = vld [vmem:[%s238 + $0x10] sm:$0xf]
    %v244 = vld [vmem:[%s238 + $0x14] sm:$0xf]
    %v245 = vld [vmem:[%s238 + $0x18] sm:$0xf]
    %v246 = vld [vmem:[%s238 + $0x1c] sm:$0xf]
    %v247 = vld [vmem:[%s238 + $0x20] sm:$0xf]
    %v248 = vld [vmem:[%s238 + $0x24] sm:$0xf]
    %v249 = vld [vmem:[%s238 + $0x28] sm:$0xf]
    %v250 = vld [vmem:[%s238 + $0x2c] sm:$0xf]
    %v251 = vld [vmem:[%s238 + $0x30] sm:$0xf]
    %v252 = vld [vmem:[%s238 + $0x34] sm:$0xf]
    %v253 = vld [vmem:[%s238 + $0x38] sm:$0xf]
    %v254 = vld [vmem:[%s238 + $0x3c] sm:$0xf]
    %v255 = vld [vmem:[%s3 + $0x2] sm:$0x1]
    %v256 = vlaneseq
    %v257 = vshrl.u32 %v256, 7
    %v258 = vsub.s32 0, %v257
    %v259 = vrot.slane %v255, %v258
    %v276 = vunpack.c.l.b16 %v239
    %v277 = vunpack.c.l.b16 %v240
    %v278 = vunpack.c.l.b16 %v241
    %v279 = vunpack.c.l.b16 %v242
    %v280 = vunpack.c.l.b16 %v243
    %v281 = vunpack.c.l.b16 %v244
    %v282 = vunpack.c.l.b16 %v245
    %v283 = vunpack.c.l.b16 %v246
    %v284 = vunpack.c.l.b16 %v247
    %v285 = vunpack.c.l.b16 %v248
    %v286 = vunpack.c.l.b16 %v249
    %v287 = vunpack.c.l.b16 %v250
    %v288 = vunpack.c.l.b16 %v251
    %v289 = vunpack.c.l.b16 %v252
    %v290 = vunpack.c.l.b16 %v253
    %v291 = vunpack.c.l.b16 %v254
    %v292 = vpack.c.b16 %v277, %v276
    %v293 = vpack.c.b16 %v279, %v278
    %v294 = vpack.c.b16 %v281, %v280
    %v295 = vpack.c.b16 %v283, %v282
    %v296 = vpack.c.b16 %v285, %v284
    %v297 = vpack.c.b16 %v287, %v286
    %v298 = vpack.c.b16 %v289, %v288
    %v299 = vpack.c.b16 %v291, %v290
    %308 = vmatprep.subr.bf16.mxu0 0
    %309 = vmatpush1.bf16.msra.mxu0 %v292
    %310 = vmatprep.subr.bf16.mxu0 0
    %311 = vmatpush1.bf16.msra.mxu0 %v293
    %312 = vmatprep.subr.bf16.mxu0 0
    %313 = vmatpush1.bf16.msra.mxu0 %v294
    %314 = vmatprep.subr.bf16.mxu0 0
    %315 = vmatpush1.bf16.msra.mxu0 %v295
    %316 = vmatprep.subr.bf16.mxu0 0
    %317 = vmatpush1.bf16.msra.mxu0 %v296
    %318 = vmatprep.subr.bf16.mxu0 0
    %319 = vmatpush1.bf16.msra.mxu0 %v297
    %320 = vmatprep.subr.bf16.mxu0 0
    %321 = vmatpush1.bf16.msra.mxu0 %v298
    %322 = vmatprep.subr.bf16.mxu0 0
    %323 = vmatpush1.bf16.msra.mxu0 %v299
    %324 = vmatprep.subr.bf16.mxu0 0
    %325 = vmatpush1.bf16.msra.mxu0 0
    %326 = vmatprep.subr.bf16.mxu0 0
    %327 = vmatpush1.bf16.msra.mxu0 0
    %328 = vmatprep.subr.bf16.mxu0 0
    %329 = vmatpush1.bf16.msra.mxu0 0
    %330 = vmatprep.subr.bf16.mxu0 0
    %331 = vmatpush1.bf16.msra.mxu0 0
    %332 = vmatprep.subr.bf16.mxu0 0
    %333 = vmatpush1.bf16.msra.mxu0 0
    %334 = vmatprep.subr.bf16.mxu0 0
    %335 = vmatpush1.bf16.msra.mxu0 0
    %336 = vmatprep.subr.bf16.mxu0 0
    %337 = vmatpush1.bf16.msra.mxu0 0
    %338 = vmatprep.subr.bf16.mxu0 0
    %339 = vmatpush1.bf16.msra.mxu0 0
    %340 = vmatprep.mubr.bf16.mxu0 0
    %341 = vmatmul.mubr.bf16.gmra.mrb[0].mxu0 %v237
    %v342 = vpop.f32.mrb[0].mxu0
    %v343 = vadd.f32 %v259, %v342
    %v344 = vpop.f32.mrb[0].mxu0
    %v345 = vpop.f32.mrb[0].mxu0
    %v346 = vpop.f32.mrb[0].mxu0
    %347 = vdwg.mxu0
    %348 = vst [vmem:[#allocation8] sm:$0xff] %v343
    // Predicated region
    $region30: #{tpu_custom_call.1} parent=1 // pred_check
      _
    $region31: #{tpu_custom_call.1} parent=1 // pred_check_branch
      %350 = sbr.rel (0) target = $region33
    $region32: #{tpu_custom_call.1} parent=1 // pred_region
      %s352 = ssub.s32 128, 128
      %353 = vsyncadd [#allocation4], %s352
      %s355 = sshll.u32 [#allocation8], 4
      %s356 = int_to_ptr.vmem [resolvable:$true] %s355
      %358 = dma.vmem_to_hbm [thread:$0]  %s356, 128, %s4, [#allocation4]
    $region33: #{tpu_custom_call.1} parent=1 // pred_fallthru
      _
    // Predicated region
    $region34: #{tpu_custom_call.1} parent=1 // pred_check
      _
    $region35: #{tpu_custom_call.1} parent=1 // pred_check_branch
      %360 = sbr.rel (0) target = $region37
    $region36: #{tpu_custom_call.1} parent=1 // pred_region
      %361 = dma.done [#allocation4], 128
    $region37: #{tpu_custom_call.1} parent=1 // pred_fallthru
      _
    %362 = vsyncpa [#allocation3], 1
    %363 = vsyncpa [#allocation6], 1
    %364 = vsyncpa [#allocation4], 1

</llo_original>
